<compile_context>
chip_gen: v5e
topology: v5e:2x2
jax: 0.10.0
libtpu: 0.0.40
codegen_flags: <defaults>
</compile_context>

<pallas_src>
import functools

import jax
import jax.numpy as jnp
from jax.experimental import pallas as pl
from jax.experimental.pallas import tpu as pltpu


def _round_up(x, m):
    return (x + m - 1) // m * m


def _cdiv(a, b):
    return (a + b - 1) // b


def _budgets():
    """(block_budget_bytes, vmem_limit_bytes) tuned per TPU generation."""
    try:
        cap = int(getattr(pltpu.get_tpu_info(), "vmem_capacity_bytes"))
    except Exception:
        cap = 64 * 1024 * 1024  # conservative (v7x-sized) fallback
    if cap >= 100 * 1024 * 1024:          # v5e / v6e: 128 MiB physical VMEM
        return 8 * 1024 * 1024, 64 * 1024 * 1024
    else:                                  # v7x: 64 MiB physical VMEM
        return 4 * 1024 * 1024, 32 * 1024 * 1024


# ---------------------------------------------------------------------------
# Large-C path: rows of the batch on sublanes, full class dim on lanes.
# ---------------------------------------------------------------------------
def _ls_ce_rows_kernel(pred_ref, tgt_ref, out_ref, *,
                       confidence, smooth_val, batch, tile_b):
    i = pl.program_id(0)

    logits = pred_ref[...].astype(jnp.float32)            # (TB, C) f32
    tgt = tgt_ref[...]                                     # (TB, 1) int32
    tb, c = logits.shape

    # Stable log-softmax pieces (shared by both loss terms).
    row_max = jnp.max(logits, axis=-1, keepdims=True)
    shifted = logits - row_max                              # (TB, C)
    lse = jnp.log(jnp.sum(jnp.exp(shifted), axis=-1, keepdims=True))   # (TB, 1)

    sum_shifted = jnp.sum(shifted, axis=-1, keepdims=True)              # (TB, 1)
    class_ids = jax.lax.broadcasted_iota(jnp.int32, (tb, c), 1)
    shifted_tgt = jnp.sum(jnp.where(class_ids == tgt, shifted, 0.0),
                          axis=-1, keepdims=True)                       # (TB, 1)

    # -(s * sum_c(logp) + (conf - s) * logp[tgt]) without materializing logp.
    row_loss = -(smooth_val * (sum_shifted - c * lse)
                 + (confidence - smooth_val) * (shifted_tgt - lse))      # (TB, 1)

    rows = jax.lax.broadcasted_iota(jnp.int32, (tb, 1), 0)
    valid = (i * tile_b + rows) < batch                    # masks ragged last block
    out_ref[0, 0] = jnp.sum(jnp.where(valid, row_loss, 0.0))


# ---------------------------------------------------------------------------
# Small-C path (C <= 64): batch on lanes, class dim on sublanes (lane-dense).
# ---------------------------------------------------------------------------
def _ls_ce_cols_kernel(pred_ref, tgt_ref, out_ref, *,
                       confidence, smooth_val, batch, tile_b):
    i = pl.program_id(0)

    logits = pred_ref[...].astype(jnp.float32)            # (C, TB) f32
    tgt = tgt_ref[...]                                     # (1, TB) int32
    c, tb = logits.shape

    col_max = jnp.max(logits, axis=0, keepdims=True)       # (1, TB)
    shifted = logits - col_max                              # (C, TB)
    lse = jnp.log(jnp.sum(jnp.exp(shifted), axis=0, keepdims=True))     # (1, TB)

    sum_shifted = jnp.sum(shifted, axis=0, keepdims=True)                # (1, TB)
    class_ids = jax.lax.broadcasted_iota(jnp.int32, (c, tb), 0)
    shifted_tgt = jnp.sum(jnp.where(class_ids == tgt, shifted, 0.0),
                          axis=0, keepdims=True)                         # (1, TB)

    col_loss = -(smooth_val * (sum_shifted - c * lse)
                 + (confidence - smooth_val) * (shifted_tgt - lse))      # (1, TB)

    cols = jax.lax.broadcasted_iota(jnp.int32, (1, tb), 1)
    valid = (i * tile_b + cols) < batch                    # masks ragged last block
    out_ref[0, 0] = jnp.sum(jnp.where(valid, col_loss, 0.0))


def label_smoothing_cross_entropy(pred, target, *, classes, smoothing=0.0):
    """pred: (B, C) float (any float dtype); target: (B,) int -> scalar f32 loss."""
    b, c = pred.shape
    assert c == classes, "pred class dim must equal `classes`"
    confidence = 1.0 - smoothing
    smooth_val = smoothing / (classes - 1) if classes > 1 else 0.0

    itemsize = jnp.dtype(pred.dtype).itemsize
    sub_align = max(8, 32 // itemsize)          # sublane packing: 8 f32 / 16 bf16 / 32 i8
    block_budget, vmem_limit = _budgets()
    # Per-"row" VMEM cost: double-buffered input + ~3x f32 working copies, lane-padded.
    small_c = c <= 64

    if small_c:
        # Lane-dense layout: (C, B), batch on the lane axis.
        pred_in = pred.T
        tgt_in = target.astype(jnp.int32).reshape(1, b)
        c_rows = _round_up(c, sub_align)
        per_lane = c_rows * (2 * itemsize + 3 * 4)
        if b <= 128:
            tb = b                                           # single full block
        else:
            tb = max(128, (block_budget // per_lane) // 128 * 128)
            tb = min(tb, _round_up(b, 128))
            if tb >= _round_up(b, 128):                      # keep >=2 steps (megacore)
                tb = _round_up((b + 1) // 2, 128)
        nb = _cdiv(b, tb)
        kernel = functools.partial(
            _ls_ce_cols_kernel, confidence=float(confidence),
            smooth_val=float(smooth_val), batch=b, tile_b=tb)
        in_specs = [
            pl.BlockSpec((c, tb), lambda i: (0, i)),         # lane-dense pred block
            pl.BlockSpec((1, tb), lambda i: (0, i)),         # lane-dense targets
        ]
    else:
        # Row layout: (TB, C), full class dim lane-resident (log-softmax needs whole rows).
        pred_in = pred
        tgt_in = target.astype(jnp.int32).reshape(b, 1)
        c_lanes = _round_up(c, 128)
        per_row = c_lanes * (2 * itemsize + 3 * 4)
        tb = max(sub_align, (block_budget // per_row) // sub_align * sub_align)
        # TODO(synk): for C so large that even TB=sub_align overflows the block budget,
        # a streaming two-pass log-softmax over the class axis would be required.
        tb = min(tb, _round_up(b, sub_align))
        if tb >= b:
            if b >= 2 * sub_align:
                tb = _round_up((b + 1) // 2, sub_align)      # >=2 steps (megacore)
            else:
                tb = b                                       # single full block
        nb = _cdiv(b, tb)
        kernel = functools.partial(
            _ls_ce_rows_kernel, confidence=float(confidence),
            smooth_val=float(smooth_val), batch=b, tile_b=tb)
        in_specs = [
            pl.BlockSpec((tb, c), lambda i: (i, 0)),
            pl.BlockSpec((tb, 1), lambda i: (i, 0)),
        ]

    partials = pl.pallas_call(
        kernel,
        out_shape=jax.ShapeDtypeStruct((nb, 1), jnp.float32),
        grid=(nb,),
        in_specs=in_specs,
        out_specs=pl.BlockSpec((1, 1), lambda i: (i, 0),
                               memory_space=pltpu.MemorySpace.SMEM),
        compiler_params=pltpu.CompilerParams(
            dimension_semantics=("parallel",),               # independent partials
            vmem_limit_bytes=vmem_limit,
        ),
    )(pred_in, tgt_in)

    # Tiny final reduction; mean folded into one multiply (no in-kernel divide).
    return jnp.sum(partials) * jnp.float32(1.0 / b)


def _reference(pred, target, classes, smoothing):
    logp = jax.nn.log_softmax(pred.astype(jnp.float32), axis=-1)
    confidence = 1.0 - smoothing
    smooth_val = smoothing / (classes - 1) if classes > 1 else 0.0
    true_dist = jnp.full_like(logp, smooth_val)
    true_dist = true_dist.at[jnp.arange(pred.shape[0]), target].set(confidence)
    return jnp.mean(jnp.sum(-true_dist * logp, axis=-1))


if __name__ == "__main__":
    smoothing = 0.1
    key = jax.random.PRNGKey(0)

    def _check(kp, b, c):
        k1, k2 = jax.random.split(kp)
        pred = jax.random.normal(k1, (b, c), dtype=jnp.float32)
        target = jax.random.randint(k2, (b,), 0, c, dtype=jnp.int32)
        out = jax.block_until_ready(
            label_smoothing_cross_entropy(pred, target, classes=c, smoothing=smoothing))
        ref = _reference(pred, target, c, smoothing)
        assert jnp.allclose(out, ref, rtol=1e-5, atol=1e-5), (b, c, out, ref)

    keys = jax.random.split(key, 4)
    # Module-consistent small shape: batch=8, classes=10 (small-C lane-dense path).
    _check(keys[0], 8, 10)
    # Odd batch, small-C path.
    _check(keys[1], 13, 10)
    # Small-C path with a multi-step grid and a ragged last (lane-masked) block.
    _check(keys[2], 200, 10)
    # Large-C path with two grid steps and a ragged last (row-masked) block.
    _check(keys[3], 40, 256)

    print("KERNEL_OK")
</pallas_src>

<mosaic_0001>
module attributes {stable_mosaic.version = 11 : i64} {
  func.func @_ls_ce_cols_kernel(%arg0: i32, %arg1: memref<10x8xf32, #tpu.memory_space<vmem>>, %arg2: memref<1x8xi32, #tpu.memory_space<vmem>>, %arg3: memref<1x1xf32, #tpu.memory_space<smem>>) attributes {dimension_semantics = [#tpu.dimension_semantics<parallel>], iteration_bounds = array<i64: 1>, scalar_prefetch = 0 : i64, scratch_operands = 0 : i64, tpu.core_type = #tpu.core_type<tc>, window_params = [{transform_indices = @transform_0, window_bounds = array<i64: 10, 8>}, {transform_indices = @transform_1, window_bounds = array<i64: 1, 8>}, {transform_indices = @transform_2, window_bounds = array<i64: 1, 1>}]} {
    %c0 = arith.constant 0 : index
    %c0_0 = arith.constant 0 : index
    %0 = vector.load %arg1[%c0, %c0_0] : memref<10x8xf32, #tpu.memory_space<vmem>>, vector<10x8xf32>
    %c0_1 = arith.constant 0 : index
    %c0_2 = arith.constant 0 : index
    %1 = vector.load %arg2[%c0_1, %c0_2] : memref<1x8xi32, #tpu.memory_space<vmem>>, vector<1x8xi32>
    %cst = arith.constant dense<0xFF800000> : vector<8xf32>
    %2 = vector.multi_reduction <maximumf>, %0, %cst [0] : vector<10x8xf32> to vector<8xf32>
    %3 = vector.shape_cast %2 : vector<8xf32> to vector<1x8xf32>
    %4 = vector.broadcast %3 : vector<1x8xf32> to vector<10x8xf32>
    %5 = arith.subf %0, %4 : vector<10x8xf32>
    %6 = math.exp %5 : vector<10x8xf32>
    %cst_3 = arith.constant dense<0.000000e+00> : vector<8xf32>
    %7 = vector.multi_reduction <add>, %6, %cst_3 [0] : vector<10x8xf32> to vector<8xf32>
    %8 = vector.shape_cast %7 : vector<8xf32> to vector<1x8xf32>
    %9 = math.log %8 : vector<1x8xf32>
    %cst_4 = arith.constant dense<0.000000e+00> : vector<8xf32>
    %10 = vector.multi_reduction <add>, %5, %cst_4 [0] : vector<10x8xf32> to vector<8xf32>
    %11 = vector.shape_cast %10 : vector<8xf32> to vector<1x8xf32>
    %12 = tpu.iota {dimensions = array<i32: 0>} : vector<10x8xi32>
    %13 = vector.broadcast %1 : vector<1x8xi32> to vector<10x8xi32>
    %14 = arith.cmpi eq, %12, %13 : vector<10x8xi32>
    %cst_5 = arith.constant 0.000000e+00 : f32
    %15 = vector.broadcast %cst_5 : f32 to vector<10x8xf32>
    %16 = arith.select %14, %5, %15 : vector<10x8xi1>, vector<10x8xf32>
    %cst_6 = arith.constant dense<0.000000e+00> : vector<8xf32>
    %17 = vector.multi_reduction <add>, %16, %cst_6 [0] : vector<10x8xf32> to vector<8xf32>
    %18 = vector.shape_cast %17 : vector<8xf32> to vector<1x8xf32>
    %cst_7 = arith.constant 1.000000e+01 : f32
    %19 = vector.broadcast %cst_7 : f32 to vector<1x8xf32>
    %20 = arith.mulf %19, %9 : vector<1x8xf32>
    %21 = arith.subf %11, %20 : vector<1x8xf32>
    %cst_8 = arith.constant 0.0111111114 : f32
    %22 = vector.broadcast %cst_8 : f32 to vector<1x8xf32>
    %23 = arith.mulf %22, %21 : vector<1x8xf32>
    %24 = arith.subf %18, %9 : vector<1x8xf32>
    %cst_9 = arith.constant 0.888888895 : f32
    %25 = vector.broadcast %cst_9 : f32 to vector<1x8xf32>
    %26 = arith.mulf %25, %24 : vector<1x8xf32>
    %27 = arith.addf %23, %26 : vector<1x8xf32>
    %cst_10 = arith.constant 0.000000e+00 : f32
    %28 = vector.broadcast %cst_10 : f32 to vector<1x8xf32>
    %29 = arith.subf %28, %27 : vector<1x8xf32>
    %30 = tpu.iota {dimensions = array<i32: 1>} : vector<1x8xi32>
    %c8_i32 = arith.constant 8 : i32
    %31 = arith.muli %arg0, %c8_i32 : i32
    %32 = vector.broadcast %31 : i32 to vector<1x8xi32>
    %33 = arith.addi %32, %30 : vector<1x8xi32>
    %c8_i32_11 = arith.constant 8 : i32
    %34 = vector.broadcast %c8_i32_11 : i32 to vector<1x8xi32>
    %35 = arith.cmpi slt, %33, %34 : vector<1x8xi32>
    %cst_12 = arith.constant 0.000000e+00 : f32
    %36 = vector.broadcast %cst_12 : f32 to vector<1x8xf32>
    %37 = arith.select %35, %29, %36 : vector<1x8xi1>, vector<1x8xf32>
    %38 = vector.shape_cast %37 : vector<1x8xf32> to vector<1x1x8xf32>
    %cst_13 = arith.constant dense<0.000000e+00> : vector<1xf32>
    %39 = vector.multi_reduction <add>, %38, %cst_13 [1, 2] : vector<1x1x8xf32> to vector<1xf32>
    %40 = vector.shape_cast %39 : vector<1xf32> to vector<1x1x1xf32>
    %41 = vector.extract %40[0, 0, 0] : f32 from vector<1x1x1xf32>
    %c0_14 = arith.constant 0 : index
    %c0_15 = arith.constant 0 : index
    %42 = memref.load %arg3[%c0_14, %c0_15] : memref<1x1xf32, #tpu.memory_space<smem>>
    memref.store %41, %arg3[%c0_14, %c0_15] : memref<1x1xf32, #tpu.memory_space<smem>>
    return
  }
  func.func @transform_0(%arg0: i32) -> (i32, i32) {
    %c0_i32 = arith.constant 0 : i32
    %c0_i32_0 = arith.constant 0 : i32
    return %c0_i32, %arg0 : i32, i32
  }
  func.func @transform_1(%arg0: i32) -> (i32, i32) {
    %c0_i32 = arith.constant 0 : i32
    %c0_i32_0 = arith.constant 0 : i32
    return %c0_i32, %arg0 : i32, i32
  }
  func.func @transform_2(%arg0: i32) -> (i32, i32) {
    %c0_i32 = arith.constant 0 : i32
    %c0_i32_0 = arith.constant 0 : i32
    return %arg0, %c0_i32 : i32, i32
  }
}

</mosaic_0001>

<llo_original>
// kernel: tpu_custom_call.1
$region0: #{tpu_custom_call.1}
  #allocation0 [shape = 'u32[]', space=smem, size = 0x4, offset = 0x4, fixed_abs, tag = 'smem constant byte address 0x4 - core index']
  #allocation1 [shape = 'u32[72,128]{1,0:T(1,128)}', space=vmem, size = 0x9000, scoped, tag = 'internal scratch']
  %s0 = inlined_call_operand.vmem [shape: f32[10,8], index: 0, kind: input, shape index: {}]
  %s1 = inlined_call_operand.vmem [shape: s32[1,8], index: 1, kind: input, shape index: {}]
  %s2 = inlined_call_operand.hbm [shape: f32[1,1], index: 2, kind: output, shape index: {}]
  %s3 = sld [smem:[#allocation0]]
  $region18: #{tpu_custom_call.1} parent=0
    _
  %s5 = ssub.s32 1, %s3
  %s6 = scalar_select 0, %s5, %s3
  $region1: #{tpu_custom_call.1} parent=0
    #allocation2 [shape = 'u8[512]{0}', space=smem, size = 0x200, scoped, tag = 'output window, operand 0, single buffered']
    #allocation3 [shape = 's32[1]{0}', space=sflag, size = 0x4, scoped, tag = 'scoped memory for tpu_custom_call.1']
    %7 = vsyncpa [#allocation3], 0
    // Predicated region
    $region2: #{tpu_custom_call.1} parent=1 // pred_check
      _
    $region3: #{tpu_custom_call.1} parent=1 // pred_check_branch
      %9 = sbr.rel (0) target = $region5
    $region4: #{tpu_custom_call.1} parent=1 // pred_region
      _
    $region5: #{tpu_custom_call.1} parent=1 // pred_fallthru
      _
    // Predicated region
    $region6: #{tpu_custom_call.1} parent=1 // pred_check
      _
    $region7: #{tpu_custom_call.1} parent=1 // pred_check_branch
      %11 = sbr.rel (0) target = $region9
    $region8: #{tpu_custom_call.1} parent=1 // pred_region
      _
    $region9: #{tpu_custom_call.1} parent=1 // pred_fallthru
      _
    %v12 = vld [vmem:[%s0] sm:$0xff]
    %v13 = vld [vmem:[%s0 + $0x8] sm:$0x3]
    %v14 = vld [vmem:[%s1] sm:$0x1]
    %vm15 = vcmask 64512
    %v16 = vsel %vm15, %v12, -inf
    %vm17 = vcmask 58368
    %v18 = vsel %vm17, %v13, -inf
    %v19 = vmax.f32 %v16, %v18
    %v20 = vrot.slane %v19, 4
    %v21 = vmax.f32 %v19, %v20
    %v22 = vrot.slane %v21, 2
    %v23 = vmax.f32 %v21, %v22
    %v24 = vrot.slane %v23, 1
    %v25 = vmax.f32 %v23, %v24
    %v26 = vsub.f32 %v12, %v25
    %v27 = vsub.f32 %v13, %v25
    %v28 = vmul.f32 %v26, 1.442695
    %v29 = vpow.pop %v28
    %v30 = vmul.f32 %v27, 1.442695
    %v31 = vpow.pop %v30
    %v32 = vsel %vm15, %v29, 0.0
    %v33 = vsel %vm17, %v31, 0.0
    %v34 = vadd.f32 %v32, %v33
    %v35 = vrot.slane %v34, 4
    %v36 = vadd.f32 %v34, %v35
    %v37 = vrot.slane %v36, 2
    %v38 = vadd.f32 %v36, %v37
    %v39 = vrot.slane %v38, 1
    %v40 = vadd.f32 %v38, %v39
    %v41 = vlog2.pop %v40
    %v42 = vmul.f32 %v41, 0.6931472
    %v43 = vsel %vm15, %v26, 0.0
    %v44 = vsel %vm17, %v27, 0.0
    %v45 = vadd.f32 %v43, %v44
    %v46 = vrot.slane %v45, 4
    %v47 = vadd.f32 %v45, %v46
    %v48 = vrot.slane %v47, 2
    %v49 = vadd.f32 %v47, %v48
    %v50 = vrot.slane %v49, 1
    %v51 = vadd.f32 %v49, %v50
    %v52 = vlaneseq
    %v53 = vshrl.u32 %v52, 7
    %v54 = vadd.s32 %v53, 8
    %v55 = vperm.slane %v14, 0
    %vm56 = vcmp.eq.s32.totalorder %v53, %v55
    %vm57 = vcmp.eq.s32.totalorder %v54, %v55
    %v58 = vsel %vm56, %v26, 0.0
    %v59 = vsel %vm57, %v27, 0.0
    %v60 = vsel %vm15, %v58, 0.0
    %v61 = vsel %vm17, %v59, 0.0
    %v62 = vadd.f32 %v60, %v61
    %v63 = vrot.slane %v62, 4
    %v64 = vadd.f32 %v62, %v63
    %v65 = vrot.slane %v64, 2
    %v66 = vadd.f32 %v64, %v65
    %v67 = vrot.slane %v66, 1
    %v68 = vadd.f32 %v66, %v67
    %v69 = vmul.f32 %v42, 10.0
    %v70 = vsub.f32 %v51, %v69
    %v71 = vmul.f32 %v70, 0.011111111
    %v72 = vsub.f32 %v68, %v42
    %v73 = vmul.f32 %v72, 0.8888889
    %v74 = vadd.f32 %v71, %v73
    %v75 = vsub.f32 0.0, %v74
    %v76 = vlaneseq
    %v77 = vand.u32 %v76, 127
    %s78 = smul.u32 0, 8
    %v79 = vstv %s78
    %v80 = vadd.s32 %v79, %v77
    %vm81 = vcmp.lt.s32.totalorder %v80, 8
    %v82 = vsel %vm81, %v75, 0.0
    %vm83 = vcmask 57344
    %v84 = vsel %vm83, %v82, 0.0
    %85 = vadd.xlane.f32.xlu0 %v84
    %v86 = vpop.xlane.xlu0 %85
    %v87 = vrot.slane %v86, 4
    %v88 = vadd.f32 %v86, %v87
    %v89 = vrot.slane %v88, 2
    %v90 = vadd.f32 %v88, %v89
    %v91 = vrot.slane %v90, 1
    %v92 = vadd.f32 %v90, %v91
    %s93 = vtos %v92
    %s94 = scalar_lea.smem [#allocation2], 0
    %95 = sst [smem:[%s94]] %s93
    // Predicated region
    $region10: #{tpu_custom_call.1} parent=1 // pred_check
      _
    $region11: #{tpu_custom_call.1} parent=1 // pred_check_branch
      %97 = sbr.rel (0) target = $region13
    $region12: #{tpu_custom_call.1} parent=1 // pred_region
      %99 = vsyncadd [#allocation3], 0
      %s101 = sshll.u32 %s2, 4
      %s102 = int_to_ptr.hbm [resolvable:$true] %s101
      %104 = dma.smem_to_hbm [#allocation2], 16, %s102, [#allocation3]
    $region13: #{tpu_custom_call.1} parent=1 // pred_fallthru
      _
    // Predicated region
    $region14: #{tpu_custom_call.1} parent=1 // pred_check
      _
    $region15: #{tpu_custom_call.1} parent=1 // pred_check_branch
      %106 = sbr.rel (0) target = $region17
    $region16: #{tpu_custom_call.1} parent=1 // pred_region
      %108 = dma.done [#allocation3], 16
    $region17: #{tpu_custom_call.1} parent=1 // pred_fallthru
      _
    %109 = sfence
    %110 = vsyncpa [#allocation3], 1

</llo_original>
